<compile_context>
chip_gen: v6e
topology: v6e:2x2x1
jax: 0.10.0
libtpu: 0.0.40
codegen_flags: <defaults>
</compile_context>

<pallas_src>
import jax
import jax.numpy as jnp
from jax.experimental import pallas as pl
from jax.experimental.pallas import tpu as pltpu


def _add_kernel(x_ref, y_ref, o_ref):
    # Pure VPU elementwise add over the whole VMEM tile.
    o_ref[...] = x_ref[...] + y_ref[...]


_SMALL_BYTES = 1 << 20           # <= 1 MiB: single-block, no-grid fast path
_TARGET_BLOCK_BYTES = 6 << 20    # ~6 MiB per pipeline buffer (v7x-friendly, harmless on v5e/v6e)
_VMEM_HEADROOM = 8 << 20         # compiler internal scratch / alignment headroom
_LANE = 128


def _sublane_multiple(dtype):
    """Native packed-sublane multiple: 8 (32-bit), 16 (16-bit), 32 (8-bit)."""
    return max(8, 32 // jnp.dtype(dtype).itemsize)


def _pick_lanes(total, sublane):
    """Widest lane-dense last dim (multiple of 128) evenly dividing `total`."""
    for cand in (1024, 512, 256):
        if total % cand == 0 and (total // cand) % sublane == 0:
            return cand
    return _LANE


def _small_shape(total):
    """Lane-dense 2-D factorization for the no-grid small path."""
    # Prefer a multiple-of-128 last dim (unmasked vst), then a multiple-of-64
    # one (bounded lane padding), else fall back to 1-D.
    for w in range(1024, 0, -_LANE):
        if total % w == 0:
            return (total // w, w)
    for w in range(1024, 56, -8):
        if total % w == 0:
            return (total // w, w)
    return (total,)


def _single_block_add(x2, y2):
    """One pallas_call, whole arrays resident in VMEM, no grid/pipeline."""
    return pl.pallas_call(
        _add_kernel,
        out_shape=jax.ShapeDtypeStruct(x2.shape, x2.dtype),
        in_specs=[pl.BlockSpec(memory_space=pltpu.MemorySpace.VMEM)] * 2,
        out_specs=pl.BlockSpec(memory_space=pltpu.MemorySpace.VMEM),
        compiler_params=pltpu.CompilerParams(vmem_limit_bytes=48 << 20),
    )(x2, y2)


def _tiled_add(x2, y2):
    """Pipelined elementwise add over a lane-dense (rows, lanes) slab."""
    rows, lanes = x2.shape
    dtype = x2.dtype
    itemsize = jnp.dtype(dtype).itemsize
    sublane = _sublane_multiple(dtype)

    # ~6 MiB per buffer, rounded down to the dtype's native sublane multiple.
    target_rows = max(
        sublane,
        (_TARGET_BLOCK_BYTES // (itemsize * lanes)) // sublane * sublane,
    )
    tile_rows = min(rows, target_rows)
    grid = (pl.cdiv(rows, tile_rows),)  # partial last block is masked by Pallas

    block_bytes = tile_rows * lanes * itemsize
    # Explicit budget: 3 arrays x 2 pipeline buffers + headroom (<= ~44 MiB,
    # stays under v7x's 64 MiB physical VMEM; avoids v5e's 16 MiB default cliff).
    vmem_limit = 3 * 2 * block_bytes + _VMEM_HEADROOM

    total = rows * lanes
    spec = pl.BlockSpec((tile_rows, lanes), lambda i: (i, 0))
    return pl.pallas_call(
        _add_kernel,
        out_shape=jax.ShapeDtypeStruct((rows, lanes), dtype),
        grid_spec=pltpu.PrefetchScalarGridSpec(
            num_scalar_prefetch=0,
            grid=grid,
            in_specs=[spec, spec],
            out_specs=spec,
        ),
        # "parallel": 1-D grid can be sharded across TensorCores (v7x megacore).
        compiler_params=pltpu.CompilerParams(
            dimension_semantics=("parallel",),
            vmem_limit_bytes=vmem_limit,
        ),
        cost_estimate=pl.CostEstimate(
            flops=total,
            transcendentals=0,
            bytes_accessed=3 * total * itemsize,
        ),
    )(x2, y2)


def pallas_add(x, y):
    """PytorchModel.forward(x, y) = x + y (same-shape, broadcast-free)."""
    assert x.shape == y.shape and x.dtype == y.dtype
    orig_shape = x.shape
    total = x.size
    itemsize = jnp.dtype(x.dtype).itemsize
    total_bytes = total * itemsize
    sublane = _sublane_multiple(x.dtype)
    tile_elems = sublane * _LANE

    # ---- small-input fast path: no grid, no pipeline machinery -------------
    if total_bytes <= _SMALL_BYTES:
        shp = _small_shape(total)
        out = _single_block_add(x.reshape(shp), y.reshape(shp))
        return out.reshape(orig_shape)

    # ---- large, "nice" sizes: free reshape to a wide lane-dense slab -------
    if total % tile_elems == 0:
        lanes = _pick_lanes(total, sublane)
        rows = total // lanes
        out = _tiled_add(x.reshape(rows, lanes), y.reshape(rows, lanes))
        return out.reshape(orig_shape)

    # ---- large + awkward element count (rare): bulk prefix + tiny tail -----
    # No jnp.pad: the tiled kernel runs on the largest sublane*128-aligned
    # prefix and the remainder (< sublane*128 elems) goes through the
    # single-block path.
    bulk = (total // tile_elems) * tile_elems
    xf = x.reshape(total)
    yf = y.reshape(total)
    lanes = _pick_lanes(bulk, sublane)
    out_bulk = _tiled_add(
        xf[:bulk].reshape(bulk // lanes, lanes),
        yf[:bulk].reshape(bulk // lanes, lanes),
    )
    out_tail = _single_block_add(xf[bulk:], yf[bulk:])
    # TODO(synk): the concatenate costs one extra pass over the output; a fully
    # concatenation-free variant would write disjoint views of a single output
    # buffer via input_output_aliases.
    out = jnp.concatenate([out_bulk.reshape(bulk), out_tail])
    return out.reshape(orig_shape)


if __name__ == "__main__":
    key = jax.random.PRNGKey(0)
    kx, ky = jax.random.split(key)

    # Small NCHW-like shape consistent with the module's forward.
    # (2*4*16*16 = 2048 elems = 8 KiB -> single-block fast path.)
    x = jax.random.normal(kx, (2, 4, 16, 16), dtype=jnp.float32)
    y = jax.random.normal(ky, (2, 4, 16, 16), dtype=jnp.float32)
    out = pallas_add(x, y)
    jax.block_until_ready(out)
    ref = x + y
    assert out.shape == ref.shape and out.dtype == ref.dtype
    assert jnp.allclose(out, ref, atol=1e-6, rtol=1e-6)

    # Medium f32 input exercising the tiled/pipelined path (lane-dense slab).
    xb = jax.random.normal(kx, (8, 16, 64, 128), dtype=jnp.float32)
    yb = jax.random.normal(ky, (8, 16, 64, 128), dtype=jnp.float32)
    outb = pallas_add(xb, yb)
    jax.block_until_ready(outb)
    assert jnp.allclose(outb, xb + yb, atol=1e-6, rtol=1e-6)

    # bf16 input exercising the dtype-aware (16-row) sublane rounding.
    xh = jax.random.normal(kx, (8, 16, 64, 128), dtype=jnp.bfloat16)
    yh = jax.random.normal(ky, (8, 16, 64, 128), dtype=jnp.bfloat16)
    outh = pallas_add(xh, yh)
    jax.block_until_ready(outh)
    assert jnp.allclose(outh.astype(jnp.float32),
                        (xh + yh).astype(jnp.float32), atol=1e-2, rtol=1e-2)

    print("KERNEL_OK")
</pallas_src>

<mosaic_0001>
module attributes {stable_mosaic.version = 11 : i64} {
  func.func @_add_kernel(%arg0: memref<2x1024xf32, #tpu.memory_space<vmem>>, %arg1: memref<2x1024xf32, #tpu.memory_space<vmem>>, %arg2: memref<2x1024xf32, #tpu.memory_space<vmem>>) attributes {dimension_semantics = [], scalar_prefetch = 0 : i64, scratch_operands = 0 : i64, tpu.core_type = #tpu.core_type<tc>} {
    %c0 = arith.constant 0 : index
    %c0_0 = arith.constant 0 : index
    %0 = vector.load %arg0[%c0, %c0_0] : memref<2x1024xf32, #tpu.memory_space<vmem>>, vector<2x1024xf32>
    %c0_1 = arith.constant 0 : index
    %c0_2 = arith.constant 0 : index
    %1 = vector.load %arg1[%c0_1, %c0_2] : memref<2x1024xf32, #tpu.memory_space<vmem>>, vector<2x1024xf32>
    %2 = arith.addf %0, %1 : vector<2x1024xf32>
    %c0_3 = arith.constant 0 : index
    %c0_4 = arith.constant 0 : index
    %3 = vector.load %arg2[%c0_3, %c0_4] : memref<2x1024xf32, #tpu.memory_space<vmem>>, vector<2x1024xf32>
    tpu.vector_store %arg2[%c0_3, %c0_4], %2 {strides = array<i32>} : memref<2x1024xf32, #tpu.memory_space<vmem>>, vector<2x1024xf32>,
    return
  }
}

</mosaic_0001>

<llo_original>
// kernel: tpu_custom_call.1
$region0: #{tpu_custom_call.1}
  #allocation0 [shape = 'u32[]', space=smem, size = 0x4, offset = 0x4, fixed_abs, tag = 'smem constant byte address 0x4 - core index']
  #allocation1 [shape = 'u32[144,128]{1,0:T(1,128)}', space=vmem, size = 0x12000, scoped, tag = 'internal scratch']
  %s0 = inlined_call_operand.hbm [shape: f32[2,1024], index: 0, kind: input, shape index: {}]
  %s1 = inlined_call_operand.hbm [shape: f32[2,1024], index: 1, kind: input, shape index: {}]
  %s2 = inlined_call_operand.hbm [shape: f32[2,1024], index: 2, kind: output, shape index: {}]
  %s3 = sld [smem:[#allocation0]]
  $region26: #{tpu_custom_call.1} parent=0
    _
  %s5 = ssub.s32 1, %s3
  %s6 = scalar_select 0, %s5, %s3
  $region1: #{tpu_custom_call.1} parent=0
    #allocation2 [shape = 'u8[8192]{0}', space=vmem, size = 0x2000, scoped, tag = 'input window, operand 0, single buffered']
    #allocation3 [shape = 's32[1]{0}', space=sflag, size = 0x4, scoped, tag = 'scoped memory for tpu_custom_call.1']
    #allocation4 [shape = 's32[1]{0}', space=sflag, size = 0x4, scoped, tag = 'scoped memory for tpu_custom_call.1']
    #allocation5 [shape = 'u8[8192]{0}', space=vmem, size = 0x2000, scoped, tag = 'input window, operand 1, single buffered']
    #allocation6 [shape = 's32[1]{0}', space=sflag, size = 0x4, scoped, tag = 'scoped memory for tpu_custom_call.1']
    #allocation7 [shape = 'u8[8192]{0}', space=vmem, size = 0x2000, scoped, tag = 'output window, operand 0, single buffered']
    %7 = vsyncpa [#allocation3], 0
    %8 = vsyncpa [#allocation6], 0
    %9 = vsyncpa [#allocation4], 0
    // Predicated region
    $region2: #{tpu_custom_call.1} parent=1 // pred_check
      _
    $region3: #{tpu_custom_call.1} parent=1 // pred_check_branch
      %11 = sbr.rel (0) target = $region5
    $region4: #{tpu_custom_call.1} parent=1 // pred_region
      %s13 = ssub.s32 256, 256
      %14 = vsyncadd [#allocation3], %s13
      %s16 = sshll.u32 [#allocation2], 4
      %s17 = int_to_ptr.vmem [resolvable:$true] %s16
      %19 = dma.hbm_to_vmem [thread:$0]  %s0, 256, %s17, [#allocation3]
    $region5: #{tpu_custom_call.1} parent=1 // pred_fallthru
      _
    // Predicated region
    $region6: #{tpu_custom_call.1} parent=1 // pred_check
      _
    $region7: #{tpu_custom_call.1} parent=1 // pred_check_branch
      %21 = sbr.rel (0) target = $region9
    $region8: #{tpu_custom_call.1} parent=1 // pred_region
      %s23 = ssub.s32 256, 256
      %24 = vsyncadd [#allocation6], %s23
      %s26 = sshll.u32 [#allocation5], 4
      %s27 = int_to_ptr.vmem [resolvable:$true] %s26
      %29 = dma.hbm_to_vmem [thread:$0]  %s1, 256, %s27, [#allocation6]
    $region9: #{tpu_custom_call.1} parent=1 // pred_fallthru
      _
    // Predicated region
    $region10: #{tpu_custom_call.1} parent=1 // pred_check
      _
    $region11: #{tpu_custom_call.1} parent=1 // pred_check_branch
      %31 = sbr.rel (0) target = $region13
    $region12: #{tpu_custom_call.1} parent=1 // pred_region
      %32 = dma.done [#allocation3], 256
    $region13: #{tpu_custom_call.1} parent=1 // pred_fallthru
      _
    // Predicated region
    $region14: #{tpu_custom_call.1} parent=1 // pred_check
      _
    $region15: #{tpu_custom_call.1} parent=1 // pred_check_branch
      %34 = sbr.rel (0) target = $region17
    $region16: #{tpu_custom_call.1} parent=1 // pred_region
      %35 = dma.done [#allocation6], 256
    $region17: #{tpu_custom_call.1} parent=1 // pred_fallthru
      _
    %v36 = vld [vmem:[#allocation2] sm:$0xff]
    %v37 = vld [vmem:[#allocation2 + $0x8] sm:$0xff]
    %v38 = vld [vmem:[#allocation5] sm:$0xff]
    %v39 = vld [vmem:[#allocation5 + $0x8] sm:$0xff]
    %v40 = vadd.f32 %v36, %v38
    %v41 = vadd.f32 %v37, %v39
    %42 = vst [vmem:[#allocation7] sm:$0xff] %v40
    %43 = vst [vmem:[#allocation7 + $0x8] sm:$0xff] %v41
    // Predicated region
    $region18: #{tpu_custom_call.1} parent=1 // pred_check
      _
    $region19: #{tpu_custom_call.1} parent=1 // pred_check_branch
      %45 = sbr.rel (0) target = $region21
    $region20: #{tpu_custom_call.1} parent=1 // pred_region
      %s47 = ssub.s32 256, 256
      %48 = vsyncadd [#allocation4], %s47
      %s50 = sshll.u32 [#allocation7], 4
      %s51 = int_to_ptr.vmem [resolvable:$true] %s50
      %53 = dma.vmem_to_hbm [thread:$0]  %s51, 256, %s2, [#allocation4]
    $region21: #{tpu_custom_call.1} parent=1 // pred_fallthru
      _
    // Predicated region
    $region22: #{tpu_custom_call.1} parent=1 // pred_check
      _
    $region23: #{tpu_custom_call.1} parent=1 // pred_check_branch
      %55 = sbr.rel (0) target = $region25
    $region24: #{tpu_custom_call.1} parent=1 // pred_region
      %56 = dma.done [#allocation4], 256
    $region25: #{tpu_custom_call.1} parent=1 // pred_fallthru
      _
    %57 = vsyncpa [#allocation3], 1
    %58 = vsyncpa [#allocation6], 1
    %59 = vsyncpa [#allocation4], 1

</llo_original>
